<compile_context>
chip_gen: v5e
topology: v5e:2x2
jax: 0.10.0
libtpu: 0.0.40
codegen_flags: <defaults>
</compile_context>

<pallas_src>
import jax
import jax.numpy as jnp
from jax.experimental import pallas as pl
from jax.experimental.pallas import tpu as pltpu


# ------------------------------ Pallas kernel ------------------------------ #

def _pred_sw_kernel(x_ref, w_ref, b_ref, o_ref):
    # x_ref: (1, tn, D)   input tile for one batch element
    # w_ref: (tn, D)      weight tile (resident across the batch grid axis)
    # b_ref: (1, tn)      bias tile   (resident across the batch grid axis)
    # o_ref: (1, 1, tn)   output tile (N on lanes -> lane-dense store)
    x = x_ref[...].astype(jnp.float32)            # (1, tn, D)
    w = w_ref[...].astype(jnp.float32)            # (tn, D) -> broadcasts
    s = jnp.sum(x * w, axis=-1)                   # (1, tn), f32 accumulation
    out = s + b_ref[...].astype(jnp.float32)      # (1, tn)
    o_ref[0] = out.astype(o_ref.dtype)


# -------------------------------- wrapper ---------------------------------- #

def _pick_n_tile(n):
    # Prefer lane-dense (multiple-of-128) tiles that divide N; else take full N.
    for t in (2048, 1024, 512, 256, 128):
        if n % t == 0:
            return t
    return n


def pred_sw(x, weights, bias):
    """out[b, n] = sum_d x[b, n, d] * W[n, d] + bias[n]   (W = weights.squeeze())."""
    b_, n_, d_ = x.shape
    w = jnp.asarray(weights).reshape(n_, d_)      # mirrors weights.squeeze()
    bia = jnp.asarray(bias).reshape(1, n_)        # mirrors bias.repeat(bs, 1)

    tn = _pick_n_tile(n_)
    assert n_ % tn == 0
    grid = (n_ // tn, b_)                         # n-tiles outer, batch inner

    out3 = pl.pallas_call(
        _pred_sw_kernel,
        out_shape=jax.ShapeDtypeStruct((b_, 1, n_), x.dtype),
        grid=grid,
        in_specs=[
            pl.BlockSpec((1, tn, d_), lambda j, i: (i, j, 0)),   # input
            pl.BlockSpec((tn, d_), lambda j, i: (j, 0)),         # weights (batch-invariant)
            pl.BlockSpec((1, tn), lambda j, i: (0, j)),          # bias    (batch-invariant)
        ],
        out_specs=pl.BlockSpec((1, 1, tn), lambda j, i: (i, 0, j)),
        compiler_params=pltpu.CompilerParams(
            dimension_semantics=("parallel", "parallel")),
    )(x, w, bia)
    return out3.reshape(b_, n_)


# --------------------------------- demo ------------------------------------ #

if __name__ == "__main__":
    B, N, D = 2, 8, 32

    key = jax.random.PRNGKey(0)
    kx, kw, kb = jax.random.split(key, 3)
    x = jax.random.normal(kx, (B, N, D), jnp.float32)
    weights = jax.random.normal(kw, (1, N, D), jnp.float32)   # squeezed inside
    bias = jax.random.normal(kb, (1, N), jnp.float32)

    out = jax.jit(pred_sw)(x, weights, bias)
    jax.block_until_ready(out)

    # Pure-JAX reference for correctness.
    ref = jnp.sum(x * weights.reshape(N, D)[None], axis=2) + bias.reshape(1, N)
    assert out.shape == (B, N)
    assert jnp.all(jnp.isfinite(out))
    assert jnp.allclose(out, ref, atol=1e-5, rtol=1e-5)
    print("KERNEL_OK")
</pallas_src>

<mosaic_0001>
module attributes {stable_mosaic.version = 11 : i64} {
  func.func @_pred_sw_kernel(%arg0: i32, %arg1: i32, %arg2: memref<1x8x32xf32, #tpu.memory_space<vmem>>, %arg3: memref<8x32xf32, #tpu.memory_space<vmem>>, %arg4: memref<1x8xf32, #tpu.memory_space<vmem>>, %arg5: memref<1x1x8xf32, #tpu.memory_space<vmem>>) attributes {dimension_semantics = [#tpu.dimension_semantics<parallel>, #tpu.dimension_semantics<parallel>], iteration_bounds = array<i64: 1, 2>, scalar_prefetch = 0 : i64, scratch_operands = 0 : i64, tpu.core_type = #tpu.core_type<tc>, window_params = [{transform_indices = @transform_0, window_bounds = array<i64: 1, 8, 32>}, {transform_indices = @transform_1, window_bounds = array<i64: 8, 32>}, {transform_indices = @transform_2, window_bounds = array<i64: 1, 8>}, {transform_indices = @transform_3, window_bounds = array<i64: 1, 1, 8>}]} {
    %c0 = arith.constant 0 : index
    %c0_0 = arith.constant 0 : index
    %c0_1 = arith.constant 0 : index
    %0 = vector.load %arg2[%c0, %c0_0, %c0_1] : memref<1x8x32xf32, #tpu.memory_space<vmem>>, vector<1x8x32xf32>
    %c0_2 = arith.constant 0 : index
    %c0_3 = arith.constant 0 : index
    %1 = vector.load %arg3[%c0_2, %c0_3] : memref<8x32xf32, #tpu.memory_space<vmem>>, vector<8x32xf32>
    %2 = vector.shape_cast %1 : vector<8x32xf32> to vector<1x8x32xf32>
    %3 = arith.mulf %0, %2 : vector<1x8x32xf32>
    %cst = arith.constant dense<0.000000e+00> : vector<1x8xf32>
    %4 = vector.multi_reduction <add>, %3, %cst [2] : vector<1x8x32xf32> to vector<1x8xf32>
    %c0_4 = arith.constant 0 : index
    %c0_5 = arith.constant 0 : index
    %5 = vector.load %arg4[%c0_4, %c0_5] : memref<1x8xf32, #tpu.memory_space<vmem>>, vector<1x8xf32>
    %6 = arith.addf %4, %5 : vector<1x8xf32>
    %c0_6 = arith.constant 0 : index
    %c0_7 = arith.constant 0 : index
    %c0_8 = arith.constant 0 : index
    %7 = vector.load %arg5[%c0_6, %c0_7, %c0_8] : memref<1x1x8xf32, #tpu.memory_space<vmem>>, vector<1x1x8xf32>
    %8 = vector.shape_cast %7 : vector<1x1x8xf32> to vector<1x8xf32>
    %9 = vector.shape_cast %6 : vector<1x8xf32> to vector<1x1x8xf32>
    tpu.vector_store %arg5[%c0_6, %c0_7, %c0_8], %9 {strides = array<i32>} : memref<1x1x8xf32, #tpu.memory_space<vmem>>, vector<1x1x8xf32>,
    return
  }
  func.func @transform_0(%arg0: i32, %arg1: i32) -> (i32, i32, i32) {
    %c0_i32 = arith.constant 0 : i32
    %c0_i32_0 = arith.constant 0 : i32
    return %arg1, %arg0, %c0_i32 : i32, i32, i32
  }
  func.func @transform_1(%arg0: i32, %arg1: i32) -> (i32, i32) {
    %c0_i32 = arith.constant 0 : i32
    %c0_i32_0 = arith.constant 0 : i32
    return %arg0, %c0_i32 : i32, i32
  }
  func.func @transform_2(%arg0: i32, %arg1: i32) -> (i32, i32) {
    %c0_i32 = arith.constant 0 : i32
    %c0_i32_0 = arith.constant 0 : i32
    return %c0_i32, %arg0 : i32, i32
  }
  func.func @transform_3(%arg0: i32, %arg1: i32) -> (i32, i32, i32) {
    %c0_i32 = arith.constant 0 : i32
    %c0_i32_0 = arith.constant 0 : i32
    return %arg1, %c0_i32, %arg0 : i32, i32, i32
  }
}

</mosaic_0001>

<llo_original>
// kernel: pred_sw.1
$region0: #{pred_sw.1}
  #allocation0 [shape = 'u32[]', space=smem, size = 0x4, offset = 0x4, fixed_abs, tag = 'smem constant byte address 0x4 - core index']
  #allocation1 [shape = 'u32[72,128]{1,0:T(1,128)}', space=vmem, size = 0x9000, scoped, tag = 'internal scratch']
  %s0 = inlined_call_operand.hbm [shape: f32[2,8,32], index: 0, kind: input, shape index: {}]
  %s1 = inlined_call_operand.hbm [shape: f32[8,32], index: 1, kind: input, shape index: {}]
  %s2 = inlined_call_operand.vmem [shape: f32[1,8], index: 2, kind: input, shape index: {}]
  %s3 = inlined_call_operand.hbm [shape: f32[2,1,8], index: 3, kind: output, shape index: {}]
  %s4 = sld [smem:[#allocation0]]
  $region53: #{pred_sw.1} parent=0
    _
  %s6 = ssub.s32 1, %s4
  %s7 = scalar_select 0, %s6, %s4
  $region1: #{pred_sw.1} parent=0
    #allocation2 [shape = 'u8[8192]{0}', space=vmem, size = 0x2000, scoped, tag = 'input window, operand 0']
    #allocation3 [shape = 's32[2]{0}', space=sflag, size = 0x8, scoped, tag = 'scoped memory for pred_sw.1']
    #allocation4 [shape = 's32[2]{0}', space=sflag, size = 0x8, scoped, tag = 'scoped memory for pred_sw.1']
    #allocation5 [shape = 'u8[4096]{0}', space=vmem, size = 0x1000, scoped, tag = 'input window, operand 1, single buffered']
    #allocation6 [shape = 's32[1]{0}', space=sflag, size = 0x4, scoped, tag = 'scoped memory for pred_sw.1']
    #allocation7 [shape = 'u8[1024]{0}', space=vmem, size = 0x400, scoped, tag = 'output window, operand 0']
    %8 = vsyncpa [#allocation3], 0
    %s9 = scalar_lea.sflag [#allocation3], 1
    %10 = vsyncpa %s9, 0
    %11 = vsyncpa [#allocation6], 0
    %12 = vsyncpa [#allocation4], 0
    %s13 = scalar_lea.sflag [#allocation4], 1
    %14 = vsyncpa %s13, 0
    loop: start=0, step=1, limit=4
    $region2: #{pred_sw.1} parent=1 // loop_pre_header
      _
    $region3: #{pred_sw.1} parent=1 // loop_header
      %s16 = sphi 0, %s20
      %p17 = scmp.ge.s32.totalorder %s16, 4
      %s23 = sphi 0, %s35
      %s24 = sphi 0, %s31
      %s25 = sphi 0, %s23
      %s26 = sphi 0, %s24
      %s27 = sphi 0, %s25
      %s28 = sphi 0, %s26
      %s40 = sphi 0, %s42
      %s43 = sphi 0, %s40
      %s44 = sphi 0, %s43
      %s60 = sphi 0, %s44
      %s66 = sphi 0, %s68
      %s69 = sphi 0, %s66
      %s70 = sphi 0, %s69
      %s86 = sphi 0, %s70
      %s92 = sphi 0, %s94
      %s95 = sphi 0, %s92
      %s96 = sphi 0, %s95
      %s112 = sphi 0, %s96
      %s120 = sphi 0, %s122
      %s123 = sphi 0, %s120
      %s124 = sphi 0, %s123
      %s140 = sphi 0, %s124
    $region4: #{pred_sw.1} parent=1 // loop_header_branch
      %19 = sbr.rel (%p17) target = $region8
    $region5: #{pred_sw.1} parent=1 // loop_body
      %s21 = ssub.s32 %s16, 1
      %s22 = ssub.s32 %s16, 2
      %s29 = sadd.s32 1, %s24
      %p30 = scmp.ge.s32.totalorder %s29, 2
      %s31 = scalar_select %p30, 0, %s29
      %s32 = sadd.s32 1, %s23
      %s33 = scalar_select %p30, %s32, %s23
      %p34 = scmp.ge.s32.totalorder %s33, 1
      %s35 = scalar_select %p34, 0, %s33
      %s36 = ssub.s32 %s24, %s31
      %s37 = ssub.s32 %s23, %s35
      %s38 = sor.u32 %s36, %s37
      %p39 = scmp.eq.s32.totalorder %s38, 0
      %s41 = sadd.s32 %s40, 1
      %s42 = scalar_select %p39, %s40, %s41
      %p45 = pneg %p39
      %p46 = scmp.eq.s32.totalorder %s16, 1
      %p47 = por %p45, %p46
      %p48 = scmp.ne.s32.totalorder %s40, %s43
      %p49 = scmp.eq.s32.totalorder %s16, 0
      %p50 = por %p48, %p49
      %p51 = scmp.ne.s32.totalorder %s40, %s43
      %p52 = scmp.eq.s32.totalorder %s21, 1
      %p53 = por %p51, %p52
      %p54 = scmp.ne.s32.totalorder %s43, %s44
      %p55 = scmp.eq.s32.totalorder %s21, 0
      %p56 = por %p54, %p55
      %p57 = scmp.ne.s32.totalorder %s43, %s44
      %p58 = scmp.eq.s32.totalorder %s22, 1
      %p59 = por %p57, %p58
      %p61 = scmp.ne.s32.totalorder %s44, %s60
      %p62 = scmp.eq.s32.totalorder %s22, 0
      %p63 = por %p61, %p62
      %s64 = ssub.s32 %s23, %s35
      %p65 = scmp.eq.s32.totalorder %s64, 0
      %s67 = sadd.s32 %s66, 1
      %s68 = scalar_select %p65, %s66, %s67
      %p71 = pneg %p65
      %p72 = scmp.eq.s32.totalorder %s16, 1
      %p73 = por %p71, %p72
      %p74 = scmp.ne.s32.totalorder %s66, %s69
      %p75 = scmp.eq.s32.totalorder %s16, 0
      %p76 = por %p74, %p75
      %p77 = scmp.ne.s32.totalorder %s66, %s69
      %p78 = scmp.eq.s32.totalorder %s21, 1
      %p79 = por %p77, %p78
      %p80 = scmp.ne.s32.totalorder %s69, %s70
      %p81 = scmp.eq.s32.totalorder %s21, 0
      %p82 = por %p80, %p81
      %p83 = scmp.ne.s32.totalorder %s69, %s70
      %p84 = scmp.eq.s32.totalorder %s22, 1
      %p85 = por %p83, %p84
      %p87 = scmp.ne.s32.totalorder %s70, %s86
      %p88 = scmp.eq.s32.totalorder %s22, 0
      %p89 = por %p87, %p88
      %s90 = ssub.s32 %s23, %s35
      %p91 = scmp.eq.s32.totalorder %s90, 0
      %s93 = sadd.s32 %s92, 1
      %s94 = scalar_select %p91, %s92, %s93
      %p97 = pneg %p91
      %p98 = scmp.eq.s32.totalorder %s16, 1
      %p99 = por %p97, %p98
      %p100 = scmp.ne.s32.totalorder %s92, %s95
      %p101 = scmp.eq.s32.totalorder %s16, 0
      %p102 = por %p100, %p101
      %p103 = scmp.ne.s32.totalorder %s92, %s95
      %p104 = scmp.eq.s32.totalorder %s21, 1
      %p105 = por %p103, %p104
      %p106 = scmp.ne.s32.totalorder %s95, %s96
      %p107 = scmp.eq.s32.totalorder %s21, 0
      %p108 = por %p106, %p107
      %p109 = scmp.ne.s32.totalorder %s95, %s96
      %p110 = scmp.eq.s32.totalorder %s22, 1
      %p111 = por %p109, %p110
      %p113 = scmp.ne.s32.totalorder %s96, %s112
      %p114 = scmp.eq.s32.totalorder %s22, 0
      %p115 = por %p113, %p114
      %s116 = ssub.s32 %s24, %s31
      %s117 = ssub.s32 %s23, %s35
      %s118 = sor.u32 %s116, %s117
      %p119 = scmp.eq.s32.totalorder %s118, 0
      %s121 = sadd.s32 %s120, 1
      %s122 = scalar_select %p119, %s120, %s121
      %p125 = pneg %p119
      %p126 = scmp.eq.s32.totalorder %s16, 1
      %p127 = por %p125, %p126
      %p128 = scmp.ne.s32.totalorder %s120, %s123
      %p129 = scmp.eq.s32.totalorder %s16, 0
      %p130 = por %p128, %p129
      %p131 = scmp.ne.s32.totalorder %s120, %s123
      %p132 = scmp.eq.s32.totalorder %s21, 1
      %p133 = por %p131, %p132
      %p134 = scmp.ne.s32.totalorder %s123, %s124
      %p135 = scmp.eq.s32.totalorder %s21, 0
      %p136 = por %p134, %p135
      %p137 = scmp.ne.s32.totalorder %s123, %s124
      %p138 = scmp.eq.s32.totalorder %s22, 1
      %p139 = por %p137, %p138
      %p141 = scmp.ne.s32.totalorder %s124, %s140
      %p142 = scmp.eq.s32.totalorder %s22, 0
      %p143 = por %p141, %p142
      %p144 = scmp.le.s32.totalorder 1, %s16
      %p145 = scmp.lt.s32.totalorder %s16, 3
      %p146 = pnand %p144, %p145
      %p147 = pneg %p146
      // Predicated region
      $region9: #{pred_sw.1} parent=5 // pred_check
        _
      $region10: #{pred_sw.1} parent=5 // pred_check_branch
        %149 = sbr.rel (%p146) target = $region12
      $region11: #{pred_sw.1} parent=5 // pred_region
        %s150 = ssub.s32 %s16, 1
        // Predicated region
        $region13: #{pred_sw.1} parent=11 // pred_check
          %p151 = pneg %p82
        $region14: #{pred_sw.1} parent=11 // pred_check_branch
          %153 = sbr.rel (%p151) target = $region16
        $region15: #{pred_sw.1} parent=11 // pred_region
          %155 = vsyncadd [#allocation6], 0
          %s156 = smul.addr %s25, 8
          %s157 = scalar_lea.hbm %s1, %s156
          %s159 = sshll.u32 %s157, 4
          %s160 = int_to_ptr.hbm [resolvable:$true] %s159
          %s161 = sshll.u32 [#allocation5], 4
          %s162 = int_to_ptr.vmem [resolvable:$true] %s161
          %164 = dma.hbm_to_vmem [thread:$0]  %s160, 128, %s162, [#allocation6]
        $region16: #{pred_sw.1} parent=11 // pred_fallthru
          _
        // Predicated region
        $region17: #{pred_sw.1} parent=11 // pred_check
          %p165 = pneg %p108
        $region18: #{pred_sw.1} parent=11 // pred_check_branch
          %167 = sbr.rel (%p165) target = $region20
        $region19: #{pred_sw.1} parent=11 // pred_region
          %p168 = scmp.lt.s32.totalorder %s25, 0
          %s169 = scalar_select %p168, %s25, 0
          %s170 = scalar_lea.vmem %s2, %s169
        $region20: #{pred_sw.1} parent=11 // pred_fallthru
          _
      $region12: #{pred_sw.1} parent=5 // pred_fallthru
        _
      %p171 = scmp.lt.s32.totalorder %s16, 2
      // Predicated region
      $region21: #{pred_sw.1} parent=5 // pred_check
        %p172 = pneg %p171
      $region22: #{pred_sw.1} parent=5 // pred_check_branch
        %174 = sbr.rel (%p172) target = $region24
      $region23: #{pred_sw.1} parent=5 // pred_region
        // Predicated region
        $region25: #{pred_sw.1} parent=23 // pred_check
          %p175 = pneg %p50
        $region26: #{pred_sw.1} parent=23 // pred_check_branch
          %177 = sbr.rel (%p175) target = $region28
        $region27: #{pred_sw.1} parent=23 // pred_region
          %s178 = sand.u32 %s40, 1
          %s179 = scalar_lea.sflag [#allocation3], %s178
          %s180 = sand.u32 %s40, 1
          %s181 = smul.addr %s180, 8
          %s182 = scalar_lea.vmem [#allocation2], %s181
          %184 = vsyncadd %s179, 0
          %s185 = sadd.s32 %s23, %s24
          %s186 = smul.addr %s185, 8
          %s187 = scalar_lea.hbm %s0, %s186
          %s189 = sshll.u32 %s187, 4
          %s190 = int_to_ptr.hbm [resolvable:$true] %s189
          %s191 = sshll.u32 %s182, 4
          %s192 = int_to_ptr.vmem [resolvable:$true] %s191
          %194 = dma.hbm_to_vmem [thread:$0]  %s190, 128, %s192, %s179
        $region28: #{pred_sw.1} parent=23 // pred_fallthru
          _
      $region24: #{pred_sw.1} parent=5 // pred_fallthru
        _
      %p195 = scmp.le.s32.totalorder 1, %s16
      %p196 = scmp.lt.s32.totalorder %s16, 3
      %p197 = pnand %p195, %p196
      %p198 = pneg %p197
      // Predicated region
      $region29: #{pred_sw.1} parent=5 // pred_check
        _
      $region30: #{pred_sw.1} parent=5 // pred_check_branch
        %200 = sbr.rel (%p197) target = $region32
      $region31: #{pred_sw.1} parent=5 // pred_region
        %s201 = ssub.s32 %s16, 1
        %s202 = sand.u32 %s43, 1
        %s203 = scalar_lea.sflag [#allocation3], %s202
        %s204 = sand.u32 %s43, 1
        %s205 = smul.addr %s204, 8
        %s206 = scalar_lea.vmem [#allocation2], %s205
        // Predicated region
        $region33: #{pred_sw.1} parent=31 // pred_check
          %p207 = pneg %p56
        $region34: #{pred_sw.1} parent=31 // pred_check_branch
          %209 = sbr.rel (%p207) target = $region36
        $region35: #{pred_sw.1} parent=31 // pred_region
          %211 = dma.done %s203, 128
        $region36: #{pred_sw.1} parent=31 // pred_fallthru
          _
        // Predicated region
        $region37: #{pred_sw.1} parent=31 // pred_check
          %p212 = pneg %p82
        $region38: #{pred_sw.1} parent=31 // pred_check_branch
          %214 = sbr.rel (%p212) target = $region40
        $region39: #{pred_sw.1} parent=31 // pred_region
          %216 = dma.done [#allocation6], 128
        $region40: #{pred_sw.1} parent=31 // pred_fallthru
          _
        %s217 = sand.u32 %s43, 1
        %s218 = scalar_lea.sflag [#allocation3], %s217
        %s219 = sand.u32 %s43, 1
        %s220 = smul.addr %s219, 8
        %s221 = scalar_lea.vmem [#allocation2], %s220
        %p222 = pneg %p56
        %p223 = pneg %p53
        %p224 = pneg %p82
        %p225 = pneg %p79
        %p226 = scmp.lt.s32.totalorder %s25, 0
        %s227 = scalar_select %p226, %s25, 0
        %s228 = scalar_lea.vmem %s2, %s227
        %p229 = pneg %p108
        %p230 = pneg %p105
        %p231 = pneg %p136
        %p232 = pneg %p133
        %s233 = sand.u32 %s123, 1
        %s234 = scalar_lea.sflag [#allocation4], %s233
        %s235 = sand.u32 %s123, 1
        %s236 = scalar_lea.vmem [#allocation7], %s235
        %p237 = scmp.lt.s32.totalorder %s25, 0
        %s238 = scalar_select %p237, %s25, 0
        %s239 = scalar_lea.vmem %s2, %s238
        %v240 = vld [vmem:[%s206] sm:$0xff]
        %v241 = vld [vmem:[#allocation5] sm:$0xff]
        %v242 = vmul.f32 %v240, %v241
        %vm243 = vcmask 261120
        %v244 = vsel %vm243, %v242, 0.0
        %245 = vadd.xlane.f32.xlu0 %v244
        %v246 = vpop.xlane.xlu0 %245
        %v247 = vld [vmem:[%s239] sm:$0x1]
        %v249 = vperm.slane %v247, 0
        %v250 = vlaneseq
        %v251 = vshrl.u32 %v250, 7
        %253 = vset.pattern.permute.xlu0 %v251
        %254 = vperm.xlu0 %253, %v249
        %v255 = vpop.permute.xlu0 %254
        %v257 = vadd.f32 %v246, %v255
        %259 = vset.pattern.permute.xlu0 0
        %260 = vperm.xlu0 %259, %v257
        %v261 = vpop.permute.xlu0 %260
        %v262 = vlaneseq
        %v263 = vand.u32 %v262, 127
        %v264 = vperm.slane %v261, %v263
        %vm266 = vcmask 57344
        %267 = vst.msk [vmem:[%s236] sm:$0x1] %vm266, %v264
        %s268 = sand.u32 %s123, 1
        %s269 = scalar_lea.sflag [#allocation4], %s268
        %s270 = sand.u32 %s123, 1
        %s271 = scalar_lea.vmem [#allocation7], %s270
        // Predicated region
        $region41: #{pred_sw.1} parent=31 // pred_check
          %p272 = pneg %p133
        $region42: #{pred_sw.1} parent=31 // pred_check_branch
          %274 = sbr.rel (%p272) target = $region44
        $region43: #{pred_sw.1} parent=31 // pred_region
          %276 = vsyncadd %s269, 0
          %s277 = sadd.s32 %s25, %s26
          %s278 = scalar_lea.hbm %s3, %s277
          %s280 = sshll.u32 %s271, 4
          %s281 = int_to_ptr.vmem [resolvable:$true] %s280
          %s282 = sshll.u32 %s278, 4
          %s283 = int_to_ptr.hbm [resolvable:$true] %s282
          %285 = dma.vmem_to_hbm [thread:$0]  %s281, 16, %s283, %s269
        $region44: #{pred_sw.1} parent=31 // pred_fallthru
          _
      $region32: #{pred_sw.1} parent=5 // pred_fallthru
        _
      %p286 = scmp.le.s32.totalorder 2, %s16
      // Predicated region
      $region45: #{pred_sw.1} parent=5 // pred_check
        %p287 = pneg %p286
      $region46: #{pred_sw.1} parent=5 // pred_check_branch
        %289 = sbr.rel (%p287) target = $region48
      $region47: #{pred_sw.1} parent=5 // pred_region
        %s290 = ssub.s32 %s16, 2
        // Predicated region
        $region49: #{pred_sw.1} parent=47 // pred_check
          %p291 = pneg %p139
        $region50: #{pred_sw.1} parent=47 // pred_check_branch
          %293 = sbr.rel (%p291) target = $region52
        $region51: #{pred_sw.1} parent=47 // pred_region
          %s294 = sand.u32 %s124, 1
          %s295 = scalar_lea.sflag [#allocation4], %s294
          %s296 = sand.u32 %s124, 1
          %s297 = scalar_lea.vmem [#allocation7], %s296
          %299 = dma.done %s295, 16
        $region52: #{pred_sw.1} parent=47 // pred_fallthru
          _
      $region48: #{pred_sw.1} parent=5 // pred_fallthru
        _
    $region6: #{pred_sw.1} parent=1 // loop_footer
      %s20 = sadd.s32 1, %s16
    $region7: #{pred_sw.1} parent=1 // loop_footer_branch
      %15 = sbr.rel target = $region3
    $region8: #{pred_sw.1} parent=1 // loop_exit
      _
    %300 = vsyncpa [#allocation3], 1
    %s301 = scalar_lea.sflag [#allocation3], 1
    %302 = vsyncpa %s301, 1
    %303 = vsyncpa [#allocation6], 1
    %304 = vsyncpa [#allocation4], 1
    %s305 = scalar_lea.sflag [#allocation4], 1
    %306 = vsyncpa %s305, 1

</llo_original>
